<compile_context>
chip_gen: v7x
topology: tpu7x:2x2x1
jax: 0.10.0
libtpu: 0.0.40
codegen_flags: <defaults>
</compile_context>

<pallas_src>
import jax
import jax.numpy as jnp
from jax import lax
from jax.experimental import pallas as pl
from jax.experimental.pallas import tpu as pltpu


def _cdiv(a: int, b: int) -> int:
    return -(-a // b)


def _round_up(x: int, m: int) -> int:
    return _cdiv(x, m) * m


def _vmem_budget_bytes() -> int:
    """Best-effort per-generation scoped VMEM budget."""
    cap = 64 * 1024 * 1024  # assume the smallest (v7x) if the query fails
    try:
        cap = int(pltpu.get_tpu_info().vmem_capacity_bytes)
    except Exception:
        pass
    # ~75% of physical VMEM: 48 MiB on v7x (64 MiB), 96 MiB on v5e/v6e (128 MiB).
    return min(cap * 3 // 4, 96 * 1024 * 1024)


def _make_linear_kernel(n_k: int, tk: int, k_rem: int):
    """Builds the kernel body; n_k / tk / k_rem are Python-level constants."""

    def kernel(x_ref, w_ref, b_ref, o_ref):
        # x_ref : (tm, tk)  activation tile
        # w_ref : (tn, tk)  weight tile, PyTorch (D_out, D_in) layout
        # b_ref : (1,  tn)  bias tile
        # o_ref : (tm, tn)  f32 output tile, resident across the K grid axis
        kk = pl.program_id(2)
        x = x_ref[...]
        w = w_ref[...]
        if k_rem:
            # Last K block overhangs the real contraction extent: those lanes
            # hold unspecified VMEM data (possibly NaN/Inf), so zero them on
            # BOTH operands before they reach the MXU.
            lim = jnp.where(kk == n_k - 1, k_rem, tk)
            x = jnp.where(lax.broadcasted_iota(jnp.int32, x.shape, 1) < lim, x, 0.0)
            w = jnp.where(lax.broadcasted_iota(jnp.int32, w.shape, 1) < lim, w, 0.0)

        # Contract the last dim of both operands -> x @ W^T on the MXU without
        # materializing W^T (same pattern as q @ k^T in attention kernels).
        part = lax.dot_general(
            x, w,
            dimension_numbers=(((1,), (1,)), ((), ())),
            preferred_element_type=jnp.float32,
        )

        @pl.when(kk == 0)
        def _():
            o_ref[...] = (part + b_ref[...]).astype(o_ref.dtype)

        @pl.when(kk > 0)
        def _():
            o_ref[...] = o_ref[...] + part.astype(o_ref.dtype)

    return kernel


def logistic_regression_forward(x, weight, bias, *, tm_max=512, tn_max=512, tk=None):
    """y = x @ weight.T + bias via a tiled Pallas TPU kernel.

    x      : (batch, input_dim)
    weight : (output_dim, input_dim)  -- PyTorch nn.Linear layout (no transpose)
    bias   : (output_dim,)
    tk     : optional override for the K tile (must be == input_dim or a
             multiple of 128); default picks full-K single pass when it fits.
    """
    batch, input_dim = x.shape
    output_dim, k_w = weight.shape
    assert k_w == input_dim and bias.shape == (output_dim,)

    # ---- N (features-out): pad the *small* operands to a lane multiple so
    # output stores are full-lane vst; x itself is never padded/copied.
    n_p = _round_up(output_dim, 128)
    tn = min(tn_max, n_p)
    while n_p % tn:
        tn -= 128
    grid_n = n_p // tn

    # ---- M (batch): balanced tiles, 8-aligned; split into >= 2 blocks for
    # batch > 256 so the 'parallel' M axis can feed both v7x TensorCores.
    num_m = max(1, _cdiv(batch, tm_max))
    if batch > 256:
        num_m = max(num_m, 2)
    tm = _round_up(_cdiv(batch, num_m), 8)
    grid_m = _cdiv(batch, tm)

    # ---- K (features-in): single pass when it fits the VMEM budget, else the
    # largest 128-multiple tile that does (remainder masked in-kernel).
    budget = _vmem_budget_bytes()
    tile_budget = int(budget * 0.85)
    if tk is None:
        itemsize = 4
        fixed = 2 * (tm * tn + tn) * itemsize       # output tile + bias (conservative)
        per_k = 2 * (tm + tn) * itemsize            # double-buffered x + W per K unit
        tk_fit = max(128, (tile_budget - fixed) // per_k)
        if tk_fit >= input_dim:
            tk = input_dim                          # single-pass over K
        else:
            tk = max(128, (tk_fit // 128) * 128)    # K-tiled, 128-aligned
    grid_k = _cdiv(input_dim, tk)
    k_rem = input_dim % tk                          # nonzero => mask last K block

    # Pad only the small operands on N (semantically a no-op; sliced off below).
    w_p = weight if n_p == output_dim else jnp.pad(
        weight, ((0, n_p - output_dim), (0, 0)))
    b_p = bias.reshape(1, output_dim)
    if n_p != output_dim:
        b_p = jnp.pad(b_p, ((0, 0), (0, n_p - output_dim)))

    grid = (grid_m, grid_n, grid_k)

    cost = pl.CostEstimate(
        flops=2 * batch * n_p * input_dim,
        transcendentals=0,
        bytes_accessed=4 * (grid_n * batch * input_dim     # x re-streamed per N block
                            + grid_m * n_p * input_dim     # W re-streamed per M block
                            + batch * n_p + n_p),
    )

    kernel = _make_linear_kernel(grid_k, tk, k_rem)

    out_p = pl.pallas_call(
        kernel,
        out_shape=jax.ShapeDtypeStruct((batch, n_p), jnp.float32),
        grid=grid,
        in_specs=[
            pl.BlockSpec((tm, tk), lambda i, j, k: (i, k)),   # x tile
            pl.BlockSpec((tn, tk), lambda i, j, k: (j, k)),   # W tile (D_out, D_in)
            pl.BlockSpec((1, tn), lambda i, j, k: (0, j)),    # bias tile
        ],
        out_specs=pl.BlockSpec((tm, tn), lambda i, j, k: (i, j)),
        compiler_params=pltpu.CompilerParams(
            dimension_semantics=("parallel", "parallel", "arbitrary"),
            vmem_limit_bytes=budget,
        ),
        cost_estimate=cost,
    )(x, w_p, b_p)

    out = out_p if n_p == output_dim else out_p[:, :output_dim]
    return out.astype(x.dtype)


if __name__ == "__main__":
    key = jax.random.PRNGKey(0)

    def make_case(k, batch, input_dim, output_dim):
        kx, kw, kb = jax.random.split(k, 3)
        bound = 1.0 / (input_dim ** 0.5)
        w = jax.random.uniform(kw, (output_dim, input_dim), jnp.float32, -bound, bound)
        b = jax.random.uniform(kb, (output_dim,), jnp.float32, -bound, bound)
        x = jax.random.normal(kx, (batch, input_dim), jnp.float32)
        return x, w, b

    k1, k2, k3 = jax.random.split(key, 3)

    # Case 1: tiny shape consistent with the module spec (single grid point,
    # lane-padded N, full-K single pass).
    x, w, b = make_case(k1, batch=8, input_dim=32, output_dim=16)
    y = logistic_regression_forward(x, w, b)
    jax.block_until_ready(y)
    assert y.shape == (8, 16)
    assert jnp.allclose(y, x @ w.T + b, atol=1e-5, rtol=1e-5)

    # Case 2: non-aligned multi-tile shape: batch split across two M blocks with
    # no host-side padding of x, N padded to 256 lanes, single pass over K.
    x2, w2, b2 = make_case(k2, batch=300, input_dim=600, output_dim=200)
    y2 = logistic_regression_forward(x2, w2, b2)
    jax.block_until_ready(y2)
    assert y2.shape == (300, 200)
    assert jnp.allclose(y2, x2 @ w2.T + b2, atol=1e-4, rtol=1e-4)

    # Case 3: force the K-tiled path (accumulate directly into o_ref across the
    # K grid axis + in-kernel masking of the K remainder: grid_k=3, rem=44).
    x3, w3, b3 = make_case(k3, batch=64, input_dim=300, output_dim=16)
    y3 = logistic_regression_forward(x3, w3, b3, tk=128)
    jax.block_until_ready(y3)
    assert y3.shape == (64, 16)
    assert jnp.allclose(y3, x3 @ w3.T + b3, atol=1e-4, rtol=1e-4)

    print("KERNEL_OK")
</pallas_src>

<mosaic_0001>
module attributes {stable_mosaic.version = 11 : i64} {
  func.func @kernel(%arg0: i32, %arg1: i32, %arg2: i32, %arg3: memref<8x32xf32, #tpu.memory_space<vmem>>, %arg4: memref<128x32xf32, #tpu.memory_space<vmem>>, %arg5: memref<1x128xf32, #tpu.memory_space<vmem>>, %arg6: memref<8x128xf32, #tpu.memory_space<vmem>>) attributes {dimension_semantics = [#tpu.dimension_semantics<parallel>, #tpu.dimension_semantics<parallel>, #tpu.dimension_semantics<arbitrary>], iteration_bounds = array<i64: 1, 1, 1>, scalar_prefetch = 0 : i64, scratch_operands = 0 : i64, tpu.core_type = #tpu.core_type<tc>, window_params = [{transform_indices = @transform_0, window_bounds = array<i64: 8, 32>}, {transform_indices = @transform_1, window_bounds = array<i64: 128, 32>}, {transform_indices = @transform_2, window_bounds = array<i64: 1, 128>}, {transform_indices = @transform_3, window_bounds = array<i64: 8, 128>}]} {
    %c0 = arith.constant 0 : index
    %c0_0 = arith.constant 0 : index
    %0 = vector.load %arg3[%c0, %c0_0] : memref<8x32xf32, #tpu.memory_space<vmem>>, vector<8x32xf32>
    %c0_1 = arith.constant 0 : index
    %c0_2 = arith.constant 0 : index
    %1 = vector.load %arg4[%c0_1, %c0_2] : memref<128x32xf32, #tpu.memory_space<vmem>>, vector<128x32xf32>
    %cst = arith.constant dense<0.000000e+00> : vector<8x128xf32>
    %2 = tpu.matmul %0, %1, %cst {dimension_numbers = #tpu.dot_dimension_numbers<[1], [1], [0], [0], [0, 0, 1, 0], [], []>} : vector<8x32xf32>, vector<128x32xf32>, vector<8x128xf32> -> vector<8x128xf32>
    %c0_i32 = arith.constant 0 : i32
    %3 = arith.cmpi eq, %arg2, %c0_i32 : i32
    %4 = arith.extui %3 : i1 to i32
    %c0_i32_3 = arith.constant 0 : i32
    %5 = arith.cmpi ne, %4, %c0_i32_3 : i32
    scf.if %5 {
      %c0_6 = arith.constant 0 : index
      %c0_7 = arith.constant 0 : index
      %9 = vector.load %arg5[%c0_6, %c0_7] : memref<1x128xf32, #tpu.memory_space<vmem>>, vector<1x128xf32>
      %10 = vector.broadcast %9 : vector<1x128xf32> to vector<8x128xf32>
      %11 = arith.addf %2, %10 : vector<8x128xf32>
      %c0_8 = arith.constant 0 : index
      %c0_9 = arith.constant 0 : index
      %12 = vector.load %arg6[%c0_8, %c0_9] : memref<8x128xf32, #tpu.memory_space<vmem>>, vector<8x128xf32>
      tpu.vector_store %arg6[%c0_8, %c0_9], %11 {strides = array<i32>} : memref<8x128xf32, #tpu.memory_space<vmem>>, vector<8x128xf32>,
    } else {
    }
    %c0_i32_4 = arith.constant 0 : i32
    %6 = arith.cmpi sgt, %arg2, %c0_i32_4 : i32
    %7 = arith.extui %6 : i1 to i32
    %c0_i32_5 = arith.constant 0 : i32
    %8 = arith.cmpi ne, %7, %c0_i32_5 : i32
    scf.if %8 {
      %c0_6 = arith.constant 0 : index
      %c0_7 = arith.constant 0 : index
      %9 = vector.load %arg6[%c0_6, %c0_7] : memref<8x128xf32, #tpu.memory_space<vmem>>, vector<8x128xf32>
      %10 = arith.addf %9, %2 : vector<8x128xf32>
      %c0_8 = arith.constant 0 : index
      %c0_9 = arith.constant 0 : index
      %11 = vector.load %arg6[%c0_8, %c0_9] : memref<8x128xf32, #tpu.memory_space<vmem>>, vector<8x128xf32>
      tpu.vector_store %arg6[%c0_8, %c0_9], %10 {strides = array<i32>} : memref<8x128xf32, #tpu.memory_space<vmem>>, vector<8x128xf32>,
    } else {
    }
    return
  }
  func.func @transform_0(%arg0: i32, %arg1: i32, %arg2: i32) -> (i32, i32) {
    %c0_i32 = arith.constant 0 : i32
    return %arg0, %arg2 : i32, i32
  }
  func.func @transform_1(%arg0: i32, %arg1: i32, %arg2: i32) -> (i32, i32) {
    %c0_i32 = arith.constant 0 : i32
    return %arg1, %arg2 : i32, i32
  }
  func.func @transform_2(%arg0: i32, %arg1: i32, %arg2: i32) -> (i32, i32) {
    %c0_i32 = arith.constant 0 : i32
    %c0_i32_0 = arith.constant 0 : i32
    return %c0_i32, %arg1 : i32, i32
  }
  func.func @transform_3(%arg0: i32, %arg1: i32, %arg2: i32) -> (i32, i32) {
    %c0_i32 = arith.constant 0 : i32
    return %arg0, %arg1 : i32, i32
  }
}

</mosaic_0001>

<llo_original>
// kernel: tpu_custom_call.1
$region0: #{tpu_custom_call.1}
  #allocation0 [shape = 'u32[]', space=smem, size = 0x4, offset = 0x4, fixed_abs, tag = 'smem constant byte address 0x4 - core index']
  #allocation1 [shape = 'u32[144,128]{1,0:T(1,128)}', space=vmem, size = 0x12000, scoped, tag = 'internal scratch']
  %s0 = inlined_call_operand.vmem [shape: f32[8,32], index: 0, kind: input, shape index: {}]
  %s1 = inlined_call_operand.vmem [shape: f32[128,32], index: 1, kind: input, shape index: {}]
  %s2 = inlined_call_operand.vmem [shape: f32[1,128], index: 2, kind: input, shape index: {}]
  %s3 = inlined_call_operand.hbm [shape: f32[8,128], index: 3, kind: output, shape index: {}]
  %s4 = sld [smem:[#allocation0]]
  $region30: #{tpu_custom_call.1} parent=0
    _
  %s6 = ssub.s32 1, %s4
  %s7 = scalar_select 0, %s6, %s4
  $region1: #{tpu_custom_call.1} parent=0
    #allocation2 [shape = 'u8[4096]{0}', space=vmem, size = 0x1000, scoped, tag = 'output window, operand 0, single buffered']
    #allocation3 [shape = 's32[1]{0}', space=sflag, size = 0x4, scoped, tag = 'scoped memory for tpu_custom_call.1']
    %8 = vsyncpa [#allocation3], 0
    // Predicated region
    $region2: #{tpu_custom_call.1} parent=1 // pred_check
      _
    $region3: #{tpu_custom_call.1} parent=1 // pred_check_branch
      %10 = sbr.rel (0) target = $region5
    $region4: #{tpu_custom_call.1} parent=1 // pred_region
      _
    $region5: #{tpu_custom_call.1} parent=1 // pred_fallthru
      _
    // Predicated region
    $region6: #{tpu_custom_call.1} parent=1 // pred_check
      _
    $region7: #{tpu_custom_call.1} parent=1 // pred_check_branch
      %12 = sbr.rel (0) target = $region9
    $region8: #{tpu_custom_call.1} parent=1 // pred_region
      _
    $region9: #{tpu_custom_call.1} parent=1 // pred_fallthru
      _
    // Predicated region
    $region10: #{tpu_custom_call.1} parent=1 // pred_check
      _
    $region11: #{tpu_custom_call.1} parent=1 // pred_check_branch
      %14 = sbr.rel (0) target = $region13
    $region12: #{tpu_custom_call.1} parent=1 // pred_region
      _
    $region13: #{tpu_custom_call.1} parent=1 // pred_fallthru
      _
    %v15 = vld [vmem:[%s0] sm:$0xff]
    %v16 = vld [vmem:[%s1] sm:$0xff]
    %v17 = vld [vmem:[%s1 + $0x8] sm:$0xff]
    %v18 = vld [vmem:[%s1 + $0x10] sm:$0xff]
    %v19 = vld [vmem:[%s1 + $0x18] sm:$0xff]
    %v20 = vld [vmem:[%s1 + $0x20] sm:$0xff]
    %v21 = vld [vmem:[%s1 + $0x28] sm:$0xff]
    %v22 = vld [vmem:[%s1 + $0x30] sm:$0xff]
    %v23 = vld [vmem:[%s1 + $0x38] sm:$0xff]
    %v24 = vld [vmem:[%s1 + $0x40] sm:$0xff]
    %v25 = vld [vmem:[%s1 + $0x48] sm:$0xff]
    %v26 = vld [vmem:[%s1 + $0x50] sm:$0xff]
    %v27 = vld [vmem:[%s1 + $0x58] sm:$0xff]
    %v28 = vld [vmem:[%s1 + $0x60] sm:$0xff]
    %v29 = vld [vmem:[%s1 + $0x68] sm:$0xff]
    %v30 = vld [vmem:[%s1 + $0x70] sm:$0xff]
    %v31 = vld [vmem:[%s1 + $0x78] sm:$0xff]
    %vm32 = vcmask 261120
    %v34 = vsel %vm32, %v15, 0
    %v37 = vsel %vm32, %v16, 0
    %v40 = vsel %vm32, %v17, 0
    %v43 = vsel %vm32, %v18, 0
    %v46 = vsel %vm32, %v19, 0
    %v49 = vsel %vm32, %v20, 0
    %v52 = vsel %vm32, %v21, 0
    %v55 = vsel %vm32, %v22, 0
    %v58 = vsel %vm32, %v23, 0
    %v61 = vsel %vm32, %v24, 0
    %v64 = vsel %vm32, %v25, 0
    %v67 = vsel %vm32, %v26, 0
    %v70 = vsel %vm32, %v27, 0
    %v73 = vsel %vm32, %v28, 0
    %v76 = vsel %vm32, %v29, 0
    %v79 = vsel %vm32, %v30, 0
    %v82 = vsel %vm32, %v31, 0
    %84 = vmatprep.subr.mxu0 0.0
    %85 = vmatpush1.xpose.msra.mxu0 %v37
    %86 = vmatprep.subr.mxu0 0.0
    %87 = vmatpush1.xpose.msra.mxu0 %v40
    %88 = vmatprep.subr.mxu0 0.0
    %89 = vmatpush1.xpose.msra.mxu0 %v43
    %90 = vmatprep.subr.mxu0 0.0
    %91 = vmatpush1.xpose.msra.mxu0 %v46
    %92 = vmatprep.subr.mxu0 0.0
    %93 = vmatpush1.xpose.msra.mxu0 %v49
    %94 = vmatprep.subr.mxu0 0.0
    %95 = vmatpush1.xpose.msra.mxu0 %v52
    %96 = vmatprep.subr.mxu0 0.0
    %97 = vmatpush1.xpose.msra.mxu0 %v55
    %98 = vmatprep.subr.mxu0 0.0
    %99 = vmatpush1.xpose.msra.mxu0 %v58
    %100 = vmatprep.subr.mxu0 0.0
    %101 = vmatpush1.xpose.msra.mxu0 %v61
    %102 = vmatprep.subr.mxu0 0.0
    %103 = vmatpush1.xpose.msra.mxu0 %v64
    %104 = vmatprep.subr.mxu0 0.0
    %105 = vmatpush1.xpose.msra.mxu0 %v67
    %106 = vmatprep.subr.mxu0 0.0
    %107 = vmatpush1.xpose.msra.mxu0 %v70
    %108 = vmatprep.subr.mxu0 0.0
    %109 = vmatpush1.xpose.msra.mxu0 %v73
    %110 = vmatprep.subr.mxu0 0.0
    %111 = vmatpush1.xpose.msra.mxu0 %v76
    %112 = vmatprep.subr.mxu0 0.0
    %113 = vmatpush1.xpose.msra.mxu0 %v79
    %114 = vmatprep.subr.mxu0 0.0
    %115 = vmatpush1.xpose.msra.mxu0 %v82
    %116 = vmatprep.subr.mxu0 0.0
    %117 = vmatpush1.xpose.msra.mxu0 0.0
    %118 = vmatprep.subr.mxu0 0.0
    %119 = vmatpush1.xpose.msra.mxu0 0.0
    %120 = vmatprep.subr.mxu0 0.0
    %121 = vmatpush1.xpose.msra.mxu0 0.0
    %122 = vmatprep.subr.mxu0 0.0
    %123 = vmatpush1.xpose.msra.mxu0 0.0
    %124 = vmatprep.subr.mxu0 0.0
    %125 = vmatpush1.xpose.msra.mxu0 0.0
    %126 = vmatprep.subr.mxu0 0.0
    %127 = vmatpush1.xpose.msra.mxu0 0.0
    %128 = vmatprep.subr.mxu0 0.0
    %129 = vmatpush1.xpose.msra.mxu0 0.0
    %130 = vmatprep.subr.mxu0 0.0
    %131 = vmatpush1.xpose.msra.mxu0 0.0
    %132 = vmatprep.subr.mxu0 0.0
    %133 = vmatpush1.xpose.msra.mxu0 0.0
    %134 = vmatprep.subr.mxu0 0.0
    %135 = vmatpush1.xpose.msra.mxu0 0.0
    %136 = vmatprep.subr.mxu0 0.0
    %137 = vmatpush1.xpose.msra.mxu0 0.0
    %138 = vmatprep.subr.mxu0 0.0
    %139 = vmatpush1.xpose.msra.mxu0 0.0
    %140 = vmatprep.subr.mxu0 0.0
    %141 = vmatpush1.xpose.msra.mxu0 0.0
    %142 = vmatprep.subr.mxu0 0.0
    %143 = vmatpush1.xpose.msra.mxu0 0.0
    %144 = vmatprep.subr.mxu0 0.0
    %145 = vmatpush1.xpose.msra.mxu0 0.0
    %146 = vmatprep.subr.mxu0 0.0
    %147 = vmatpush1.xpose.msra.mxu0 0.0
    %148 = vmatprep.mubr.f32.mxu0 0.0
    %149 = vmatmul.mubr.f32.gmra.mrb[0].mxu0 %v34
    %v150 = vpop.f32.mrb[0].mxu0
    %v151 = vadd.f32 0.0, %v150
    %v152 = vpop.f32.mrb[0].mxu0
    %153 = vdwg.mxu0
    %p154 = scmp.eq.s32.totalorder 0, 0
    // Predicated region
    $region14: #{tpu_custom_call.1} parent=1 // pred_check
      %p155 = pneg %p154
    $region15: #{tpu_custom_call.1} parent=1 // pred_check_branch
      %157 = sbr.rel (%p155) target = $region17
    $region16: #{tpu_custom_call.1} parent=1 // pred_region
      %v158 = vld [vmem:[%s2] sm:$0x1]
      %v160 = vlaneseq
      %v161 = vshrl.u32 %v160, 7
      %v162 = vsub.s32 0, %v161
      %v163 = vrot.slane %v158, %v162
      %v165 = vadd.f32 %v151, %v163
      %166 = vst [vmem:[#allocation2] sm:$0xff] %v165
    $region17: #{tpu_custom_call.1} parent=1 // pred_fallthru
      _
    %p167 = scmp.gt.s32.totalorder 0, 0
    // Predicated region
    $region18: #{tpu_custom_call.1} parent=1 // pred_check
      %p168 = pneg %p167
    $region19: #{tpu_custom_call.1} parent=1 // pred_check_branch
      %170 = sbr.rel (%p168) target = $region21
    $region20: #{tpu_custom_call.1} parent=1 // pred_region
      %v171 = vld [vmem:[#allocation2] sm:$0xff]
      %v172 = vadd.f32 %v171, %v151
      %173 = vst [vmem:[#allocation2] sm:$0xff] %v172
    $region21: #{tpu_custom_call.1} parent=1 // pred_fallthru
      _
    // Predicated region
    $region22: #{tpu_custom_call.1} parent=1 // pred_check
      _
    $region23: #{tpu_custom_call.1} parent=1 // pred_check_branch
      %175 = sbr.rel (0) target = $region25
    $region24: #{tpu_custom_call.1} parent=1 // pred_region
      %s177 = ssub.s32 128, 128
      %178 = vsyncadd [#allocation3], %s177
      %s180 = sshll.u32 [#allocation2], 4
      %s181 = int_to_ptr.vmem [resolvable:$true] %s180
      %183 = dma.vmem_to_hbm [thread:$0]  %s181, 128, %s3, [#allocation3]
    $region25: #{tpu_custom_call.1} parent=1 // pred_fallthru
      _
    // Predicated region
    $region26: #{tpu_custom_call.1} parent=1 // pred_check
      _
    $region27: #{tpu_custom_call.1} parent=1 // pred_check_branch
      %185 = sbr.rel (0) target = $region29
    $region28: #{tpu_custom_call.1} parent=1 // pred_region
      %186 = dma.done [#allocation3], 128
    $region29: #{tpu_custom_call.1} parent=1 // pred_fallthru
      _
    %187 = vsyncpa [#allocation3], 1

</llo_original>
